<compile_context>
chip_gen: v5e
topology: v5e:2x2
jax: 0.10.0
libtpu: 0.0.40
codegen_flags: <defaults>
</compile_context>

<pallas_src>
import functools

import jax
import jax.numpy as jnp
from jax.experimental import pallas as pl
from jax.experimental.pallas import tpu as pltpu


def _fused_heads_kernel(x_ref, w13_ref, b13_ref, wout_ref, bout_ref, out_ref,
                        *, num_bin_labels):
    """Fused dual-head classifier + softmax (single grid point, all VMEM).

    x_ref    : [B, H]     CLS rows (f32).
    w13_ref  : [H, 2H]    bf16, [w1 | w3] fused dense weights.
    b13_ref  : [1, 2H]    f32 fused dense bias.
    wout_ref : [2H, 2+L]  bf16, block-diag [[w2,0],[0,w4]] output projection.
    bout_ref : [1, 2+L]   f32 fused output bias.
    out_ref  : [B, 2+L]   softmax(prob) || softmax(type_prob).
    """
    x = x_ref[...].astype(jnp.bfloat16)                                 # [B, H]

    # Single MXU pass for both heads' dense layers (f32 accumulation).
    h = jnp.tanh(
        jnp.dot(x, w13_ref[...], preferred_element_type=jnp.float32)
        + b13_ref[...]
    )                                                                   # [B, 2H]

    # Single MXU pass for both output projections (block-diagonal weight).
    logits = (
        jnp.dot(h.astype(jnp.bfloat16), wout_ref[...],
                preferred_element_type=jnp.float32)
        + bout_ref[...]
    )                                                                   # [B, 2+L]

    def _softmax(l):
        m = jnp.max(l, axis=-1, keepdims=True)
        e = jnp.exp(l - m)
        return e / jnp.sum(e, axis=-1, keepdims=True)                   # exact

    n_bin = num_bin_labels
    out_ref[...] = jnp.concatenate(
        [_softmax(logits[:, :n_bin]), _softmax(logits[:, n_bin:])], axis=-1
    ).astype(out_ref.dtype)


def fuse_params(params, compute_dtype=jnp.bfloat16):
    """One-time offline packing of the two heads into fused bf16 weights.

    params (all f32, [in, out] layout): (w1, b1, w2, b2, w3, b3, w4, b4).
    Returns (w13 [H,2H], b13 [1,2H], wout [2H,2+L], bout [1,2+L]).
    """
    (w1, b1, w2, b2, w3, b3, w4, b4) = params
    H = w1.shape[0]
    n2, nL = w2.shape[1], w4.shape[1]

    w13 = jnp.concatenate([w1, w3], axis=1).astype(compute_dtype)       # [H, 2H]
    b13 = jnp.concatenate([b1, b3], axis=1).astype(jnp.float32)         # [1, 2H]

    wout = jnp.zeros((2 * H, n2 + nL), jnp.float32)
    wout = wout.at[:H, :n2].set(w2)
    wout = wout.at[H:, n2:].set(w4)
    wout = wout.astype(compute_dtype)                                   # [2H, 2+L]
    bout = jnp.concatenate([b2, b4], axis=1).astype(jnp.float32)        # [1, 2+L]
    return (w13, b13, wout, bout)


def model_forward(features, fused_params, num_bin_labels=2):
    """features: [B, S, H] (encoder last_hidden_state).

    Returns (prob [B, 2], type_prob [B, num_labels]).
    """
    B, S, H = features.shape
    w13, b13, wout, bout = fused_params
    n_total = wout.shape[1]

    # CLS slice in the wrapper: a trivial B*H*4-byte XLA copy.  Presenting it
    # as a normal VMEM BlockSpec input lets Pallas issue its DMA in the
    # pipeline prologue, concurrently with the weight DMAs (no serialized
    # in-body copy on the critical path).
    x = features[:, 0, :]                                               # [B, H]

    vmem = pl.BlockSpec(memory_space=pltpu.MemorySpace.VMEM)

    weight_bytes = (w13.size * w13.dtype.itemsize
                    + wout.size * wout.dtype.itemsize
                    + 4 * (b13.size + bout.size))
    io_bytes = B * H * x.dtype.itemsize + 4 * B * n_total
    # v7x has only 64 MiB physical VMEM (32 MiB default scoped); size the
    # scoped request explicitly and leave headroom rather than relying on
    # generation-dependent defaults.
    vmem_limit = int(min(max(weight_bytes + io_bytes + (2 << 20), 16 << 20),
                         56 << 20))

    cost = pl.CostEstimate(
        flops=2 * B * H * (2 * H) + 2 * B * (2 * H) * n_total,
        transcendentals=B * (2 * H) + B * n_total,
        bytes_accessed=weight_bytes + io_bytes,
    )

    fused_probs = pl.pallas_call(
        functools.partial(_fused_heads_kernel, num_bin_labels=num_bin_labels),
        out_shape=jax.ShapeDtypeStruct((B, n_total), jnp.float32),
        in_specs=[vmem, vmem, vmem, vmem, vmem],
        out_specs=vmem,
        compiler_params=pltpu.CompilerParams(vmem_limit_bytes=vmem_limit),
        cost_estimate=cost,
    )(x, w13, b13, wout, bout)

    prob = fused_probs[:, :num_bin_labels]
    type_prob = fused_probs[:, num_bin_labels:]
    return prob, type_prob


def init_params(key, hidden_size, num_labels):
    """Deterministic param init matching nn.Linear shapes (stored as [in, out])."""
    ks = jax.random.split(key, 8)
    s_h = 1.0 / jnp.sqrt(hidden_size)

    def uni(k, shape, scale):
        return jax.random.uniform(k, shape, jnp.float32, -scale, scale)

    # classifier (2 labels)
    w1 = uni(ks[0], (hidden_size, hidden_size), s_h)
    b1 = uni(ks[1], (1, hidden_size), s_h)
    w2 = uni(ks[2], (hidden_size, 2), s_h)
    b2 = uni(ks[3], (1, 2), s_h)
    # type_classifier (num_labels)
    w3 = uni(ks[4], (hidden_size, hidden_size), s_h)
    b3 = uni(ks[5], (1, hidden_size), s_h)
    w4 = uni(ks[6], (hidden_size, num_labels), s_h)
    b4 = uni(ks[7], (1, num_labels), s_h)
    return (w1, b1, w2, b2, w3, b3, w4, b4)


def _reference(features, params):
    """Pure-JAX f32 reference for correctness checking."""
    (w1, b1, w2, b2, w3, b3, w4, b4) = params
    x = features[:, 0, :]
    l1 = jnp.tanh(x @ w1 + b1) @ w2 + b2
    l2 = jnp.tanh(x @ w3 + b3) @ w4 + b4
    return jax.nn.softmax(l1, axis=-1), jax.nn.softmax(l2, axis=-1)


if __name__ == "__main__":
    B, S, H = 2, 8, 32          # batch, seq, hidden
    NUM_LABELS = 4              # type_classifier label count

    key = jax.random.PRNGKey(0)
    k_feat, k_param = jax.random.split(key)

    features = jax.random.normal(k_feat, (B, S, H), dtype=jnp.float32)
    params = init_params(k_param, H, NUM_LABELS)
    fused = fuse_params(params)          # one-time offline weight packing

    fwd = jax.jit(functools.partial(model_forward, num_bin_labels=2))
    prob, type_prob = fwd(features, fused)
    jax.block_until_ready((prob, type_prob))

    ref_prob, ref_type_prob = _reference(features, params)
    assert prob.shape == (B, 2) and type_prob.shape == (B, NUM_LABELS)
    # rows sum to 1 (exact softmax denominator, f32)
    assert jnp.allclose(jnp.sum(prob, axis=-1), 1.0, atol=1e-5)
    assert jnp.allclose(jnp.sum(type_prob, axis=-1), 1.0, atol=1e-5)
    # bf16 weights -> loosened tolerance vs f32 reference
    assert jnp.allclose(prob, ref_prob, atol=2e-2, rtol=2e-2)
    assert jnp.allclose(type_prob, ref_type_prob, atol=2e-2, rtol=2e-2)

    print("KERNEL_OK")
</pallas_src>

<mosaic_0001>
module attributes {stable_mosaic.version = 11 : i64} {
  func.func @_fused_heads_kernel(%arg0: memref<2x32xf32, #tpu.memory_space<vmem>>, %arg1: memref<32x64xbf16, #tpu.memory_space<vmem>>, %arg2: memref<1x64xf32, #tpu.memory_space<vmem>>, %arg3: memref<64x6xbf16, #tpu.memory_space<vmem>>, %arg4: memref<1x6xf32, #tpu.memory_space<vmem>>, %arg5: memref<2x6xf32, #tpu.memory_space<vmem>>) attributes {dimension_semantics = [], scalar_prefetch = 0 : i64, scratch_operands = 0 : i64, tpu.core_type = #tpu.core_type<tc>} {
    %c0 = arith.constant 0 : index
    %c0_0 = arith.constant 0 : index
    %0 = vector.load %arg0[%c0, %c0_0] : memref<2x32xf32, #tpu.memory_space<vmem>>, vector<2x32xf32>
    %1 = arith.truncf %0 : vector<2x32xf32> to vector<2x32xbf16>
    %c0_1 = arith.constant 0 : index
    %c0_2 = arith.constant 0 : index
    %2 = vector.load %arg1[%c0_1, %c0_2] : memref<32x64xbf16, #tpu.memory_space<vmem>>, vector<32x64xbf16>
    %cst = arith.constant dense<0.000000e+00> : vector<2x64xf32>
    %3 = tpu.matmul %1, %2, %cst {dimension_numbers = #tpu.dot_dimension_numbers<[1], [0], [0], [1], [0, 0, 1, 1], [], []>} : vector<2x32xbf16>, vector<32x64xbf16>, vector<2x64xf32> -> vector<2x64xf32>
    %c0_3 = arith.constant 0 : index
    %c0_4 = arith.constant 0 : index
    %4 = vector.load %arg2[%c0_3, %c0_4] : memref<1x64xf32, #tpu.memory_space<vmem>>, vector<1x64xf32>
    %5 = vector.broadcast %4 : vector<1x64xf32> to vector<2x64xf32>
    %6 = arith.addf %3, %5 : vector<2x64xf32>
    %7 = math.tanh %6 : vector<2x64xf32>
    %8 = arith.truncf %7 : vector<2x64xf32> to vector<2x64xbf16>
    %c0_5 = arith.constant 0 : index
    %c0_6 = arith.constant 0 : index
    %9 = vector.load %arg3[%c0_5, %c0_6] : memref<64x6xbf16, #tpu.memory_space<vmem>>, vector<64x6xbf16>
    %cst_7 = arith.constant dense<0.000000e+00> : vector<2x6xf32>
    %10 = tpu.matmul %8, %9, %cst_7 {dimension_numbers = #tpu.dot_dimension_numbers<[1], [0], [0], [1], [0, 0, 1, 1], [], []>} : vector<2x64xbf16>, vector<64x6xbf16>, vector<2x6xf32> -> vector<2x6xf32>
    %c0_8 = arith.constant 0 : index
    %c0_9 = arith.constant 0 : index
    %11 = vector.load %arg4[%c0_8, %c0_9] : memref<1x6xf32, #tpu.memory_space<vmem>>, vector<1x6xf32>
    %12 = vector.broadcast %11 : vector<1x6xf32> to vector<2x6xf32>
    %13 = arith.addf %10, %12 : vector<2x6xf32>
    %14 = vector.extract_strided_slice %13 {offsets = [0, 0], sizes = [2, 2], strides = [1, 1]} : vector<2x6xf32> to vector<2x2xf32>
    %cst_10 = arith.constant dense<0xFF800000> : vector<2xf32>
    %15 = vector.multi_reduction <maximumf>, %14, %cst_10 [1] : vector<2x2xf32> to vector<2xf32>
    %16 = vector.shape_cast %15 : vector<2xf32> to vector<2x1xf32>
    %17 = vector.broadcast %16 : vector<2x1xf32> to vector<2x2xf32>
    %18 = arith.subf %14, %17 : vector<2x2xf32>
    %19 = math.exp %18 : vector<2x2xf32>
    %cst_11 = arith.constant dense<0.000000e+00> : vector<2xf32>
    %20 = vector.multi_reduction <add>, %19, %cst_11 [1] : vector<2x2xf32> to vector<2xf32>
    %21 = vector.shape_cast %20 : vector<2xf32> to vector<2x1xf32>
    %22 = vector.broadcast %21 : vector<2x1xf32> to vector<2x2xf32>
    %23 = arith.divf %19, %22 : vector<2x2xf32>
    %24 = vector.extract_strided_slice %13 {offsets = [0, 2], sizes = [2, 4], strides = [1, 1]} : vector<2x6xf32> to vector<2x4xf32>
    %cst_12 = arith.constant dense<0xFF800000> : vector<2xf32>
    %25 = vector.multi_reduction <maximumf>, %24, %cst_12 [1] : vector<2x4xf32> to vector<2xf32>
    %26 = vector.shape_cast %25 : vector<2xf32> to vector<2x1xf32>
    %27 = vector.broadcast %26 : vector<2x1xf32> to vector<2x4xf32>
    %28 = arith.subf %24, %27 : vector<2x4xf32>
    %29 = math.exp %28 : vector<2x4xf32>
    %cst_13 = arith.constant dense<0.000000e+00> : vector<2xf32>
    %30 = vector.multi_reduction <add>, %29, %cst_13 [1] : vector<2x4xf32> to vector<2xf32>
    %31 = vector.shape_cast %30 : vector<2xf32> to vector<2x1xf32>
    %32 = vector.broadcast %31 : vector<2x1xf32> to vector<2x4xf32>
    %33 = arith.divf %29, %32 : vector<2x4xf32>
    %34 = tpu.concatenate %23, %33 in 1 : vector<2x2xf32>, vector<2x4xf32> -> vector<2x6xf32>
    %c0_14 = arith.constant 0 : index
    %c0_15 = arith.constant 0 : index
    %35 = vector.load %arg5[%c0_14, %c0_15] : memref<2x6xf32, #tpu.memory_space<vmem>>, vector<2x6xf32>
    tpu.vector_store %arg5[%c0_14, %c0_15], %34 {strides = array<i32>} : memref<2x6xf32, #tpu.memory_space<vmem>>, vector<2x6xf32>,
    return
  }
}

</mosaic_0001>

<llo_original>
// kernel: model_forward.1
$region0: #{model_forward.1}
  #allocation0 [shape = 'u32[]', space=smem, size = 0x4, offset = 0x4, fixed_abs, tag = 'smem constant byte address 0x4 - core index']
  #allocation1 [shape = 'u32[72,128]{1,0:T(1,128)}', space=vmem, size = 0x9000, scoped, tag = 'internal scratch']
  %s0 = inlined_call_operand.vmem [shape: f32[2,32], index: 0, kind: input, shape index: {}]
  %s1 = inlined_call_operand.vmem [shape: bf16[32,64], index: 1, kind: input, shape index: {}]
  %s2 = inlined_call_operand.vmem [shape: f32[1,64], index: 2, kind: input, shape index: {}]
  %s3 = inlined_call_operand.vmem [shape: bf16[64,6], index: 3, kind: input, shape index: {}]
  %s4 = inlined_call_operand.vmem [shape: f32[1,6], index: 4, kind: input, shape index: {}]
  %s5 = inlined_call_operand.vmem [shape: f32[2,6], index: 5, kind: output, shape index: {}]
  %s6 = sld [smem:[#allocation0]]
  $region30: #{model_forward.1} parent=0
    _
  %s8 = ssub.s32 1, %s6
  %s9 = scalar_select 0, %s8, %s6
  // Predicated region
  $region2: #{model_forward.1} parent=0 // pred_check
    _
  $region3: #{model_forward.1} parent=0 // pred_check_branch
    %11 = sbr.rel (0) target = $region5
  $region4: #{model_forward.1} parent=0 // pred_region
    _
  $region5: #{model_forward.1} parent=0 // pred_fallthru
    _
  // Predicated region
  $region6: #{model_forward.1} parent=0 // pred_check
    _
  $region7: #{model_forward.1} parent=0 // pred_check_branch
    %13 = sbr.rel (0) target = $region9
  $region8: #{model_forward.1} parent=0 // pred_region
    _
  $region9: #{model_forward.1} parent=0 // pred_fallthru
    _
  // Predicated region
  $region10: #{model_forward.1} parent=0 // pred_check
    _
  $region11: #{model_forward.1} parent=0 // pred_check_branch
    %15 = sbr.rel (0) target = $region13
  $region12: #{model_forward.1} parent=0 // pred_region
    _
  $region13: #{model_forward.1} parent=0 // pred_fallthru
    _
  // Predicated region
  $region14: #{model_forward.1} parent=0 // pred_check
    _
  $region15: #{model_forward.1} parent=0 // pred_check_branch
    %17 = sbr.rel (0) target = $region17
  $region16: #{model_forward.1} parent=0 // pred_region
    _
  $region17: #{model_forward.1} parent=0 // pred_fallthru
    _
  // Predicated region
  $region18: #{model_forward.1} parent=0 // pred_check
    _
  $region19: #{model_forward.1} parent=0 // pred_check_branch
    %19 = sbr.rel (0) target = $region21
  $region20: #{model_forward.1} parent=0 // pred_region
    _
  $region21: #{model_forward.1} parent=0 // pred_fallthru
    _
  %v21 = vld [vmem:[%s0] sm:$0x3]
  %v22 = vpack.c.bf16 %v21, %v21
  %v23 = vld [vmem:[%s1] sm:$0xf]
  %v24 = vld [vmem:[%s1 + $0x4] sm:$0xf]
  %v25 = vld [vmem:[%s1 + $0x8] sm:$0xf]
  %v26 = vld [vmem:[%s1 + $0xc] sm:$0xf]
  %v27 = vld [vmem:[%s2] sm:$0x1]
  %v29 = vperm.slane %v27, 0
  %v35 = vunpack.c.l.b16 %v23
  %v36 = vunpack.c.l.b16 %v24
  %v37 = vunpack.c.l.b16 %v25
  %v38 = vunpack.c.l.b16 %v26
  %v39 = vpack.c.b16 %v36, %v35
  %v40 = vpack.c.b16 %v38, %v37
  %vm43 = vcmask 261120
  %v45 = vsel %vm43, %v22, 0
  %47 = vmatpush.bf16.msra.mxu0 0
  %48 = vmatpush.bf16.msra.mxu0 0
  %49 = vmatpush.bf16.msra.mxu0 0
  %50 = vmatpush.bf16.msra.mxu0 0
  %51 = vmatpush.bf16.msra.mxu0 0
  %52 = vmatpush.bf16.msra.mxu0 0
  %53 = vmatpush.bf16.msra.mxu0 %v40
  %54 = vmatpush.bf16.msra.mxu0 %v39
  %55 = vmatmul.bf16.gmra.mxu0 %v45
  %v56 = vpop.f32.mrf.mxu0
  %v57 = vadd.f32 %v29, %v56
  %v58 = vpop.f32.mrf.mxu0
  %59 = vdwg.mxu0
  %v60 = vtanh.pop %v57
  %v61 = vpack.c.bf16 %v60, %v60
  %v62 = vld [vmem:[%s3] sm:$0xf]
  %v63 = vld [vmem:[%s3 + $0x4] sm:$0xf]
  %v64 = vld [vmem:[%s3 + $0x8] sm:$0xf]
  %v65 = vld [vmem:[%s3 + $0xc] sm:$0xf]
  %v66 = vld [vmem:[%s3 + $0x10] sm:$0xf]
  %v67 = vld [vmem:[%s3 + $0x14] sm:$0xf]
  %v68 = vld [vmem:[%s3 + $0x18] sm:$0xf]
  %v69 = vld [vmem:[%s3 + $0x1c] sm:$0xf]
  %v70 = vld [vmem:[%s4] sm:$0x1]
  %v72 = vperm.slane %v70, 0
  %v82 = vunpack.c.l.b16 %v62
  %v83 = vunpack.c.l.b16 %v63
  %v84 = vunpack.c.l.b16 %v64
  %v85 = vunpack.c.l.b16 %v65
  %v86 = vunpack.c.l.b16 %v66
  %v87 = vunpack.c.l.b16 %v67
  %v88 = vunpack.c.l.b16 %v68
  %v89 = vunpack.c.l.b16 %v69
  %v90 = vpack.c.b16 %v83, %v82
  %v91 = vpack.c.b16 %v85, %v84
  %v92 = vpack.c.b16 %v87, %v86
  %v93 = vpack.c.b16 %v89, %v88
  %vm98 = vcmask 523264
  %v100 = vsel %vm98, %v61, 0
  %102 = vmatpush.bf16.msra.mxu0 0
  %103 = vmatpush.bf16.msra.mxu0 0
  %104 = vmatpush.bf16.msra.mxu0 0
  %105 = vmatpush.bf16.msra.mxu0 0
  %106 = vmatpush.bf16.msra.mxu0 %v93
  %107 = vmatpush.bf16.msra.mxu0 %v92
  %108 = vmatpush.bf16.msra.mxu0 %v91
  %109 = vmatpush.bf16.msra.mxu0 %v90
  %110 = vmatmul.bf16.gmra.mxu0 %v100
  %v111 = vpop.f32.mrf.mxu0
  %v112 = vadd.f32 %v72, %v111
  %v113 = vpop.f32.mrf.mxu0
  %114 = vdwg.mxu0
  %vm115 = vcmask 9216
  %v116 = vsel %vm115, %v112, -inf
  %117 = vmax.xlane.f32.xlu0 %v116
  %v118 = vpop.xlane.xlu0 %117
  %v119 = vsub.f32 %v112, %v118
  %v120 = vmul.f32 %v119, 1.442695
  %v121 = vpow.pop %v120
  %v122 = vsel %vm115, %v121, 0.0
  %123 = vadd.xlane.f32.xlu0 %v122
  %v124 = vpop.xlane.xlu0 %123
  %v125 = vrcp.pop %v124
  %v126 = vmul.f32 %v124, %v125
  %v127 = vsub.f32 1.0, %v126
  %v128 = vmul.f32 %v125, %v127
  %v129 = vadd.f32 %v125, %v128
  %vm130 = vweird.f32 %v124
  %vm131 = vweird.f32 %v125
  %vm132 = vmor %vm130, %vm131
  %v133 = vsel %vm132, %v125, %v129
  %v134 = vand.u32 2147483647, %v124
  %vm135 = vcmp.eq.f32.partialorder %v134, 8.507059e+37
  %v136 = vand.u32 %v124, 2147483648
  %v137 = vor.u32 1.1754944e-38, %v136
  %v138 = vsel %vm135, %v137, %v133
  %v139 = vmul.f32 %v121, %v138
  %vm140 = vcmask 42000
  %v141 = vsel %vm140, %v112, -inf
  %142 = vmax.xlane.f32.xlu0 %v141
  %v143 = vpop.xlane.xlu0 %142
  %v144 = vsub.f32 %v112, %v143
  %v145 = vmul.f32 %v144, 1.442695
  %v146 = vpow.pop %v145
  %148 = vrot.lane.b32.xlu0 %v146, 126
  %v149 = vpop.permute.xlu0 %148
  %vm151 = vcmask 25600
  %v152 = vsel %vm151, %v149, 0.0
  %153 = vadd.xlane.f32.xlu0 %v152
  %v154 = vpop.xlane.xlu0 %153
  %v155 = vrcp.pop %v154
  %v156 = vmul.f32 %v154, %v155
  %v157 = vsub.f32 1.0, %v156
  %v158 = vmul.f32 %v155, %v157
  %v159 = vadd.f32 %v155, %v158
  %vm160 = vweird.f32 %v154
  %vm161 = vweird.f32 %v155
  %vm162 = vmor %vm160, %vm161
  %v163 = vsel %vm162, %v155, %v159
  %v164 = vand.u32 2147483647, %v154
  %vm165 = vcmp.eq.f32.partialorder %v164, 8.507059e+37
  %v166 = vand.u32 %v154, 2147483648
  %v167 = vor.u32 1.1754944e-38, %v166
  %v168 = vsel %vm165, %v167, %v163
  %v169 = vmul.f32 %v146, %v168
  %vm170 = vcmask 15360
  %v171 = vsel %vm170, %v139, %v169
  %vm172 = vcmask 41984
  %173 = vst.msk [vmem:[%s5] sm:$0x3] %vm172, %v171
  // Predicated region
  $region22: #{model_forward.1} parent=0 // pred_check
    _
  $region23: #{model_forward.1} parent=0 // pred_check_branch
    %175 = sbr.rel (0) target = $region25
  $region24: #{model_forward.1} parent=0 // pred_region
    _
  $region25: #{model_forward.1} parent=0 // pred_fallthru
    _
  // Predicated region
  $region26: #{model_forward.1} parent=0 // pred_check
    _
  $region27: #{model_forward.1} parent=0 // pred_check_branch
    %177 = sbr.rel (0) target = $region29
  $region28: #{model_forward.1} parent=0 // pred_region
    _
  $region29: #{model_forward.1} parent=0 // pred_fallthru
    _

</llo_original>
